<compile_context>
chip_gen: v5e
topology: v5e:2x2
jax: 0.10.0
libtpu: 0.0.40
codegen_flags: <defaults>
</compile_context>

<pallas_src>
import functools
import math

import numpy as np
import jax
import jax.numpy as jnp
from jax.experimental import pallas as pl
from jax.experimental.pallas import tpu as pltpu

_OPERATOR_VMEM_BUDGET = 12 << 20  # target bytes for one spectral tile's F+Gr+Gi


@functools.lru_cache(maxsize=8)
def _build_operators(a, b):
    """Fused 2D rfft2 / irfft2 operators (norm='ortho'), spectrally tiled, bf16.

    Returns (w_pad, M_pad, tm, n_tiles, f_tiles, gr_tiles, gi_tiles) where
      f_tiles : (n, 2*tm, ab)  rows [0:tm) = Re(DFT), [tm:2tm) = Im(DFT)
      gr_tiles: (n, ab, tm)    inverse operator, real part (Hermitian fold baked in)
      gi_tiles: (n, ab, tm)    inverse operator, imag part
    """
    w_half = b // 2 + 1
    w_pad = -(-w_half // 16) * 16          # bf16 sublane tile boundary
    M = a * w_pad
    ab = a * b

    # Spectral tile size: keep one tile's operators within the VMEM budget.
    tm_cap = max(128, ((_OPERATOR_VMEM_BUDGET // (8 * ab)) // 128) * 128)
    if tm_cap >= M:
        tm, n_tiles = M, 1
    else:
        tm = tm_cap
        n_tiles = -(-M // tm)
    M_pad = n_tiles * tm

    scale = 1.0 / math.sqrt(ab)
    k = np.arange(a)[:, None, None, None]        # frequency row
    l = np.arange(w_pad)[None, :, None, None]    # frequency col (padded)
    m = np.arange(a)[None, None, :, None]        # spatial row
    nn = np.arange(b)[None, None, None, :]       # spatial col
    theta = 2.0 * np.pi * (k * m / a + l * nn / b)           # (a, w_pad, a, b)
    valid = (np.arange(w_pad) < w_half).astype(np.float64)[None, :, None, None]

    # Forward: Z[(k,l)] = (1/sqrt(ab)) * sum_{(m,n)} x[(m,n)] e^{-i theta}
    f_re = (np.cos(theta) * scale * valid).reshape(M, ab)
    f_im = (-np.sin(theta) * scale * valid).reshape(M, ab)

    # Inverse (Hermitian-folded):
    #   y[(m,n)] = (1/sqrt(ab)) * sum_{(k,l<w)} mult[l] * Re(T[(k,l)] e^{+i theta})
    mult = np.full((w_pad,), 2.0)
    mult[0] = 1.0
    if b % 2 == 0:
        mult[w_half - 1] = 1.0
    mult[w_half:] = 0.0
    mult4 = mult[None, :, None, None]
    g_re = (mult4 * np.cos(theta) * scale).reshape(M, ab).T      # (ab, M)
    g_im = (-mult4 * np.sin(theta) * scale).reshape(M, ab).T     # (ab, M)

    # Zero-pad the spectral axis to M_pad (padded rows/cols contribute nothing).
    pad = M_pad - M
    f_re = np.pad(f_re, ((0, pad), (0, 0)))
    f_im = np.pad(f_im, ((0, pad), (0, 0)))
    g_re = np.pad(g_re, ((0, 0), (0, pad)))
    g_im = np.pad(g_im, ((0, 0), (0, pad)))

    f_tiles = np.concatenate(
        [f_re.reshape(n_tiles, tm, ab), f_im.reshape(n_tiles, tm, ab)], axis=1)
    gr_tiles = np.transpose(g_re.reshape(ab, n_tiles, tm), (1, 0, 2))
    gi_tiles = np.transpose(g_im.reshape(ab, n_tiles, tm), (1, 0, 2))

    return (w_pad, M_pad, tm, n_tiles,
            jnp.asarray(f_tiles, jnp.bfloat16),
            jnp.asarray(gr_tiles, jnp.bfloat16),
            jnp.asarray(gi_tiles, jnp.bfloat16))


def _filter_block(x_ref, f_ref, gr_ref, gi_ref, w_ref):
    """One spectral tile: forward DFT matmul, complex filter (f32), inverse matmul."""
    x = x_ref[0]                                                  # (ab, cblk) bf16
    f = f_ref[0]                                                  # (2*tm, ab) bf16
    zf = jnp.dot(f, x, preferred_element_type=jnp.float32)        # (2*tm, cblk) f32

    tm = f.shape[0] // 2
    wfull = w_ref[0]                                              # (2*tm, cblk) f32
    zr, zi = zf[:tm], zf[tm:]
    wr, wi = wfull[:tm], wfull[tm:]
    tr = (zr * wr - zi * wi).astype(jnp.bfloat16)                 # (tm, cblk)
    ti = (zr * wi + zi * wr).astype(jnp.bfloat16)

    return (jnp.dot(gr_ref[0], tr, preferred_element_type=jnp.float32)
            + jnp.dot(gi_ref[0], ti, preferred_element_type=jnp.float32))


def _make_kernel(n_tiles):
    if n_tiles == 1:
        def kernel(x_ref, f_ref, gr_ref, gi_ref, w_ref, o_ref):
            o_ref[0] = _filter_block(x_ref, f_ref, gr_ref, gi_ref, w_ref)
        return kernel

    def kernel(x_ref, f_ref, gr_ref, gi_ref, w_ref, o_ref, acc_ref):
        mi = pl.program_id(2)

        @pl.when(mi == 0)
        def _():
            acc_ref[...] = jnp.zeros_like(acc_ref)

        acc_ref[...] += _filter_block(x_ref, f_ref, gr_ref, gi_ref, w_ref)

        @pl.when(mi == pl.num_programs(2) - 1)
        def _():
            o_ref[0] = acc_ref[...]

    return kernel


def _pick_channel_block(c_pad, batch):
    cblk = min(c_pad, 1024)
    while c_pad % cblk != 0:          # c_pad is a multiple of 128, so this terminates
        cblk -= 128
    # v7x megacore: make sure there are >= 2 parallel programs.
    if batch * (c_pad // cblk) < 2 and cblk >= 256:
        cblk //= 2
    return cblk


def global_filter(x, complex_weight, spatial_size=None):
    """Pallas equivalent of GlobalFilter.forward.  x: (B, N, C) float."""
    B, N, C = x.shape
    if spatial_size is None:
        a = b = math.isqrt(N)
    else:
        a, b = spatial_size
    assert a * b == N, "spatial size must match sequence length"
    w_half = b // 2 + 1
    assert complex_weight.shape == (a, w_half, C, 2), \
        "complex_weight must have shape (a, b//2+1, C, 2)"

    ab = a * b
    w_pad, M_pad, tm, n_tiles, f_tiles, gr_tiles, gi_tiles = _build_operators(a, b)
    M = a * w_pad

    # Lane-dense channel axis: pad to a multiple of 128, slice afterwards.
    C_pad = -(-C // 128) * 128
    cblk = _pick_channel_block(C_pad, B)

    # Learned complex weight -> per-tile stacked (n, 2*tm, C_pad), kept in f32.
    def _prep_weight(part):
        part = jnp.pad(part.astype(jnp.float32),
                       ((0, 0), (0, w_pad - w_half), (0, 0))).reshape(M, C)
        part = jnp.pad(part, ((0, M_pad - M), (0, C_pad - C)))
        return part.reshape(n_tiles, tm, C_pad)

    w_tiles = jnp.concatenate(
        [_prep_weight(complex_weight[..., 0]), _prep_weight(complex_weight[..., 1])],
        axis=1)                                                   # (n, 2*tm, C_pad)

    # Input in native (B, N, C) layout, bf16 for the MXU, channel-padded.
    x_flat = jnp.pad(x.reshape(B, ab, C).astype(jnp.bfloat16),
                     ((0, 0), (0, 0), (0, C_pad - C)))

    grid = (C_pad // cblk, B, n_tiles)

    def _op_spec(block_shape, index_map):
        if n_tiles == 1:   # grid-constant operators: single-buffer them
            return pl.BlockSpec(block_shape, index_map, pipeline_mode=pl.Buffered(1))
        return pl.BlockSpec(block_shape, index_map)

    x_spec = pl.BlockSpec((1, ab, cblk), lambda ci, bi, mi: (bi, 0, ci))
    f_spec = _op_spec((1, 2 * tm, ab), lambda ci, bi, mi: (mi, 0, 0))
    gr_spec = _op_spec((1, ab, tm), lambda ci, bi, mi: (mi, 0, 0))
    gi_spec = _op_spec((1, ab, tm), lambda ci, bi, mi: (mi, 0, 0))
    w_spec = pl.BlockSpec((1, 2 * tm, cblk), lambda ci, bi, mi: (mi, 0, ci))
    out_spec = pl.BlockSpec((1, ab, cblk), lambda ci, bi, mi: (bi, 0, ci))

    scratch_shapes = [] if n_tiles == 1 else [pltpu.VMEM((ab, cblk), jnp.float32)]

    # Explicit VMEM budget sized to the actual resident buffers (+ headroom).
    op_buf = 1 if n_tiles == 1 else 2
    resident = (op_buf * (2 * tm) * ab * 2          # F tile(s), bf16
                + op_buf * 2 * ab * tm * 2          # Gr + Gi tile(s), bf16
                + 2 * (2 * tm) * cblk * 4           # weight block, f32, double-buffered
                + 2 * ab * cblk * 2                 # x block, bf16, double-buffered
                + 2 * ab * cblk * 4                 # out block, f32, double-buffered
                + (ab * cblk * 4 if n_tiles > 1 else 0)   # accumulator scratch
                + (2 * tm) * cblk * 12)             # zf / tr / ti intermediates
    vmem_limit = min(max(int(resident * 1.4) + (2 << 20), 32 << 20), 64 << 20)

    flops = 8 * B * M_pad * ab * C_pad              # forward + inverse matmuls
    bytes_accessed = (x_flat.size * 2 + B * ab * C_pad * 4
                      + f_tiles.size * 2 + gr_tiles.size * 2 + gi_tiles.size * 2
                      + w_tiles.size * 4)

    y = pl.pallas_call(
        _make_kernel(n_tiles),
        out_shape=jax.ShapeDtypeStruct((B, ab, C_pad), jnp.float32),
        grid=grid,
        in_specs=[x_spec, f_spec, gr_spec, gi_spec, w_spec],
        out_specs=out_spec,
        scratch_shapes=scratch_shapes,
        compiler_params=pltpu.CompilerParams(
            dimension_semantics=("parallel", "parallel", "arbitrary"),
            vmem_limit_bytes=vmem_limit),
        cost_estimate=pl.CostEstimate(flops=flops, transcendentals=0,
                                      bytes_accessed=bytes_accessed),
    )(x_flat, f_tiles, gr_tiles, gi_tiles, w_tiles)

    return y[:, :, :C].reshape(B, N, C)


if __name__ == "__main__":
    key = jax.random.PRNGKey(0)
    B, C = 2, 64
    a = b = 8
    N = a * b
    h, w = a, b // 2 + 1

    kx, kw = jax.random.split(key)
    x = jax.random.normal(kx, (B, N, C), dtype=jnp.float32)
    # Deterministic init, mirrors torch.randn(h, w, dim, 2) * 0.02
    complex_weight = 0.02 * jax.random.normal(kw, (h, w, C, 2), dtype=jnp.float32)

    y = jax.block_until_ready(global_filter(x, complex_weight))

    # Pure-JAX reference (same semantics as the PyTorch module).
    x4 = x.reshape(B, a, b, C).astype(jnp.float32)
    Xf = jnp.fft.rfft2(x4, axes=(1, 2), norm="ortho")
    Wc = complex_weight[..., 0] + 1j * complex_weight[..., 1]
    y_ref = jnp.fft.irfft2(Xf * Wc, s=(a, b), axes=(1, 2),
                           norm="ortho").real.reshape(B, N, C)

    err = float(jnp.max(jnp.abs(y - y_ref)))
    # bf16 operands (f32 accumulation) -> slightly looser tolerance than pure f32.
    assert err < 2e-3, f"max abs error too large: {err}"
    print("KERNEL_OK")
</pallas_src>

<mosaic_0001>
module attributes {stable_mosaic.version = 11 : i64} {
  func.func @kernel(%arg0: i32, %arg1: i32, %arg2: i32, %arg3: memref<1x64x128xbf16, #tpu.memory_space<vmem>>, %arg4: memref<1x256x64xbf16, #tpu.memory_space<vmem>>, %arg5: memref<1x64x128xbf16, #tpu.memory_space<vmem>>, %arg6: memref<1x64x128xbf16, #tpu.memory_space<vmem>>, %arg7: memref<1x256x128xf32, #tpu.memory_space<vmem>>, %arg8: memref<1x64x128xf32, #tpu.memory_space<vmem>>) attributes {dimension_semantics = [#tpu.dimension_semantics<parallel>, #tpu.dimension_semantics<parallel>, #tpu.dimension_semantics<arbitrary>], iteration_bounds = array<i64: 1, 2, 1>, scalar_prefetch = 0 : i64, scratch_operands = 0 : i64, tpu.core_type = #tpu.core_type<tc>, window_params = [{transform_indices = @transform_0, window_bounds = array<i64: 1, 64, 128>}, {pipeline_mode = #tpu.pipeline_mode<synchronous>, transform_indices = @transform_1, window_bounds = array<i64: 1, 256, 64>}, {pipeline_mode = #tpu.pipeline_mode<synchronous>, transform_indices = @transform_2, window_bounds = array<i64: 1, 64, 128>}, {pipeline_mode = #tpu.pipeline_mode<synchronous>, transform_indices = @transform_3, window_bounds = array<i64: 1, 64, 128>}, {transform_indices = @transform_4, window_bounds = array<i64: 1, 256, 128>}, {transform_indices = @transform_5, window_bounds = array<i64: 1, 64, 128>}]} {
    %c0 = arith.constant 0 : index
    %c0_0 = arith.constant 0 : index
    %c0_1 = arith.constant 0 : index
    %0 = vector.load %arg3[%c0, %c0_0, %c0_1] : memref<1x64x128xbf16, #tpu.memory_space<vmem>>, vector<1x64x128xbf16>
    %1 = vector.shape_cast %0 : vector<1x64x128xbf16> to vector<64x128xbf16>
    %c0_2 = arith.constant 0 : index
    %c0_3 = arith.constant 0 : index
    %c0_4 = arith.constant 0 : index
    %2 = vector.load %arg4[%c0_2, %c0_3, %c0_4] : memref<1x256x64xbf16, #tpu.memory_space<vmem>>, vector<1x256x64xbf16>
    %3 = vector.shape_cast %2 : vector<1x256x64xbf16> to vector<256x64xbf16>
    %cst = arith.constant dense<0.000000e+00> : vector<256x128xf32>
    %4 = tpu.matmul %3, %1, %cst {dimension_numbers = #tpu.dot_dimension_numbers<[1], [0], [0], [1], [0, 0, 1, 1], [], []>} : vector<256x64xbf16>, vector<64x128xbf16>, vector<256x128xf32> -> vector<256x128xf32>
    %c0_5 = arith.constant 0 : index
    %c0_6 = arith.constant 0 : index
    %c0_7 = arith.constant 0 : index
    %5 = vector.load %arg7[%c0_5, %c0_6, %c0_7] : memref<1x256x128xf32, #tpu.memory_space<vmem>>, vector<1x256x128xf32>
    %6 = vector.shape_cast %5 : vector<1x256x128xf32> to vector<256x128xf32>
    %7 = vector.extract_strided_slice %4 {offsets = [0, 0], sizes = [128, 128], strides = [1, 1]} : vector<256x128xf32> to vector<128x128xf32>
    %8 = vector.extract_strided_slice %4 {offsets = [128, 0], sizes = [128, 128], strides = [1, 1]} : vector<256x128xf32> to vector<128x128xf32>
    %9 = vector.extract_strided_slice %6 {offsets = [0, 0], sizes = [128, 128], strides = [1, 1]} : vector<256x128xf32> to vector<128x128xf32>
    %10 = vector.extract_strided_slice %6 {offsets = [128, 0], sizes = [128, 128], strides = [1, 1]} : vector<256x128xf32> to vector<128x128xf32>
    %11 = arith.mulf %7, %9 : vector<128x128xf32>
    %12 = arith.mulf %8, %10 : vector<128x128xf32>
    %13 = arith.subf %11, %12 : vector<128x128xf32>
    %14 = arith.truncf %13 : vector<128x128xf32> to vector<128x128xbf16>
    %15 = arith.mulf %7, %10 : vector<128x128xf32>
    %16 = arith.mulf %8, %9 : vector<128x128xf32>
    %17 = arith.addf %15, %16 : vector<128x128xf32>
    %18 = arith.truncf %17 : vector<128x128xf32> to vector<128x128xbf16>
    %c0_8 = arith.constant 0 : index
    %c0_9 = arith.constant 0 : index
    %c0_10 = arith.constant 0 : index
    %19 = vector.load %arg5[%c0_8, %c0_9, %c0_10] : memref<1x64x128xbf16, #tpu.memory_space<vmem>>, vector<1x64x128xbf16>
    %20 = vector.shape_cast %19 : vector<1x64x128xbf16> to vector<64x128xbf16>
    %cst_11 = arith.constant dense<0.000000e+00> : vector<64x128xf32>
    %21 = tpu.matmul %20, %14, %cst_11 {dimension_numbers = #tpu.dot_dimension_numbers<[1], [0], [0], [1], [0, 0, 1, 1], [], []>} : vector<64x128xbf16>, vector<128x128xbf16>, vector<64x128xf32> -> vector<64x128xf32>
    %c0_12 = arith.constant 0 : index
    %c0_13 = arith.constant 0 : index
    %c0_14 = arith.constant 0 : index
    %22 = vector.load %arg6[%c0_12, %c0_13, %c0_14] : memref<1x64x128xbf16, #tpu.memory_space<vmem>>, vector<1x64x128xbf16>
    %23 = vector.shape_cast %22 : vector<1x64x128xbf16> to vector<64x128xbf16>
    %cst_15 = arith.constant dense<0.000000e+00> : vector<64x128xf32>
    %24 = tpu.matmul %23, %18, %cst_15 {dimension_numbers = #tpu.dot_dimension_numbers<[1], [0], [0], [1], [0, 0, 1, 1], [], []>} : vector<64x128xbf16>, vector<128x128xbf16>, vector<64x128xf32> -> vector<64x128xf32>
    %25 = arith.addf %21, %24 : vector<64x128xf32>
    %c0_16 = arith.constant 0 : index
    %c0_17 = arith.constant 0 : index
    %c0_18 = arith.constant 0 : index
    %26 = vector.load %arg8[%c0_16, %c0_17, %c0_18] : memref<1x64x128xf32, #tpu.memory_space<vmem>>, vector<1x64x128xf32>
    %27 = vector.shape_cast %26 : vector<1x64x128xf32> to vector<64x128xf32>
    %28 = vector.shape_cast %25 : vector<64x128xf32> to vector<1x64x128xf32>
    tpu.vector_store %arg8[%c0_16, %c0_17, %c0_18], %28 {strides = array<i32>} : memref<1x64x128xf32, #tpu.memory_space<vmem>>, vector<1x64x128xf32>,
    return
  }
  func.func @transform_0(%arg0: i32, %arg1: i32, %arg2: i32) -> (i32, i32, i32) {
    %c0_i32 = arith.constant 0 : i32
    %c0_i32_0 = arith.constant 0 : i32
    return %arg1, %c0_i32, %arg0 : i32, i32, i32
  }
  func.func @transform_1(%arg0: i32, %arg1: i32, %arg2: i32) -> (i32, i32, i32) {
    %c0_i32 = arith.constant 0 : i32
    %c0_i32_0 = arith.constant 0 : i32
    %c0_i32_1 = arith.constant 0 : i32
    return %arg2, %c0_i32, %c0_i32_0 : i32, i32, i32
  }
  func.func @transform_2(%arg0: i32, %arg1: i32, %arg2: i32) -> (i32, i32, i32) {
    %c0_i32 = arith.constant 0 : i32
    %c0_i32_0 = arith.constant 0 : i32
    %c0_i32_1 = arith.constant 0 : i32
    return %arg2, %c0_i32, %c0_i32_0 : i32, i32, i32
  }
  func.func @transform_3(%arg0: i32, %arg1: i32, %arg2: i32) -> (i32, i32, i32) {
    %c0_i32 = arith.constant 0 : i32
    %c0_i32_0 = arith.constant 0 : i32
    %c0_i32_1 = arith.constant 0 : i32
    return %arg2, %c0_i32, %c0_i32_0 : i32, i32, i32
  }
  func.func @transform_4(%arg0: i32, %arg1: i32, %arg2: i32) -> (i32, i32, i32) {
    %c0_i32 = arith.constant 0 : i32
    %c0_i32_0 = arith.constant 0 : i32
    return %arg2, %c0_i32, %arg0 : i32, i32, i32
  }
  func.func @transform_5(%arg0: i32, %arg1: i32, %arg2: i32) -> (i32, i32, i32) {
    %c0_i32 = arith.constant 0 : i32
    %c0_i32_0 = arith.constant 0 : i32
    return %arg1, %c0_i32, %arg0 : i32, i32, i32
  }
}

</mosaic_0001>

<llo_original>
// kernel: tpu_custom_call.1
$region0: #{tpu_custom_call.1}
  #allocation0 [shape = 'u32[]', space=smem, size = 0x4, offset = 0x4, fixed_abs, tag = 'smem constant byte address 0x4 - core index']
  #allocation1 [shape = 'u32[72,128]{1,0:T(1,128)}', space=vmem, size = 0x9000, scoped, tag = 'internal scratch']
  %s0 = inlined_call_operand.vmem [shape: bf16[2,64,128], index: 0, kind: input, shape index: {}]
  %s1 = inlined_call_operand.vmem [shape: bf16[1,256,64], index: 1, kind: input, shape index: {}]
  %s2 = inlined_call_operand.vmem [shape: bf16[1,64,128], index: 2, kind: input, shape index: {}]
  %s3 = inlined_call_operand.vmem [shape: bf16[1,64,128], index: 3, kind: input, shape index: {}]
  %s4 = inlined_call_operand.hbm [shape: f32[1,256,128], index: 4, kind: input, shape index: {}]
  %s5 = inlined_call_operand.hbm [shape: f32[2,64,128], index: 5, kind: output, shape index: {}]
  %s6 = sld [smem:[#allocation0]]
  $region57: #{tpu_custom_call.1} parent=0
    _
  %s8 = ssub.s32 1, %s6
  %s9 = scalar_select 0, %s8, %s6
  $region1: #{tpu_custom_call.1} parent=0
    #allocation2 [shape = 'u8[131072]{0}', space=vmem, size = 0x20000, scoped, tag = 'input window, operand 4, single buffered']
    #allocation3 [shape = 's32[2]{0}', space=sflag, size = 0x8, scoped, tag = 'scoped memory for tpu_custom_call.1']
    #allocation4 [shape = 's32[2]{0}', space=sflag, size = 0x8, scoped, tag = 'scoped memory for tpu_custom_call.1']
    #allocation5 [shape = 'u8[65536]{0}', space=vmem, size = 0x10000, scoped, tag = 'output window, operand 0']
    %10 = vsyncpa [#allocation3], 0
    %11 = vsyncpa [#allocation4], 0
    %s12 = scalar_lea.sflag [#allocation4], 1
    %13 = vsyncpa %s12, 0
    loop: start=0, step=1, limit=4
    $region2: #{tpu_custom_call.1} parent=1 // loop_pre_header
      _
    $region3: #{tpu_custom_call.1} parent=1 // loop_header
      %s15 = sphi 0, %s19
      %p16 = scmp.ge.s32.totalorder %s15, 4
      %s22 = sphi 0, %s41
      %s23 = sphi 0, %s37
      %s24 = sphi 0, %s33
      %s25 = sphi 0, %s22
      %s26 = sphi 0, %s23
      %s27 = sphi 0, %s24
      %s28 = sphi 0, %s25
      %s29 = sphi 0, %s26
      %s30 = sphi 0, %s27
      %s46 = sphi 0, %s48
      %s49 = sphi 0, %s46
      %s50 = sphi 0, %s49
      %s66 = sphi 0, %s50
      %s72 = sphi 0, %s74
      %s75 = sphi 0, %s72
      %s76 = sphi 0, %s75
      %s92 = sphi 0, %s76
      %s98 = sphi 0, %s100
      %s101 = sphi 0, %s98
      %s102 = sphi 0, %s101
      %s118 = sphi 0, %s102
      %s124 = sphi 0, %s126
      %s127 = sphi 0, %s124
      %s128 = sphi 0, %s127
      %s144 = sphi 0, %s128
      %s152 = sphi 0, %s154
      %s155 = sphi 0, %s152
      %s156 = sphi 0, %s155
      %s172 = sphi 0, %s156
      %s180 = sphi 0, %s182
      %s183 = sphi 0, %s180
      %s184 = sphi 0, %s183
      %s200 = sphi 0, %s184
    $region4: #{tpu_custom_call.1} parent=1 // loop_header_branch
      %18 = sbr.rel (%p16) target = $region8
    $region5: #{tpu_custom_call.1} parent=1 // loop_body
      %s20 = ssub.s32 %s15, 1
      %s21 = ssub.s32 %s15, 2
      %s31 = sadd.s32 1, %s24
      %p32 = scmp.ge.s32.totalorder %s31, 1
      %s33 = scalar_select %p32, 0, %s31
      %s34 = sadd.s32 1, %s23
      %s35 = scalar_select %p32, %s34, %s23
      %p36 = scmp.ge.s32.totalorder %s35, 2
      %s37 = scalar_select %p36, 0, %s35
      %s38 = sadd.s32 1, %s22
      %s39 = scalar_select %p36, %s38, %s22
      %p40 = scmp.ge.s32.totalorder %s39, 1
      %s41 = scalar_select %p40, 0, %s39
      %s42 = ssub.s32 %s23, %s37
      %s43 = ssub.s32 %s22, %s41
      %s44 = sor.u32 %s42, %s43
      %p45 = scmp.eq.s32.totalorder %s44, 0
      %s47 = sadd.s32 %s46, 1
      %s48 = scalar_select %p45, %s46, %s47
      %p51 = pneg %p45
      %p52 = scmp.eq.s32.totalorder %s15, 1
      %p53 = por %p51, %p52
      %p54 = scmp.ne.s32.totalorder %s46, %s49
      %p55 = scmp.eq.s32.totalorder %s15, 0
      %p56 = por %p54, %p55
      %p57 = scmp.ne.s32.totalorder %s46, %s49
      %p58 = scmp.eq.s32.totalorder %s20, 1
      %p59 = por %p57, %p58
      %p60 = scmp.ne.s32.totalorder %s49, %s50
      %p61 = scmp.eq.s32.totalorder %s20, 0
      %p62 = por %p60, %p61
      %p63 = scmp.ne.s32.totalorder %s49, %s50
      %p64 = scmp.eq.s32.totalorder %s21, 1
      %p65 = por %p63, %p64
      %p67 = scmp.ne.s32.totalorder %s50, %s66
      %p68 = scmp.eq.s32.totalorder %s21, 0
      %p69 = por %p67, %p68
      %s70 = ssub.s32 %s24, %s33
      %p71 = scmp.eq.s32.totalorder %s70, 0
      %s73 = sadd.s32 %s72, 1
      %s74 = scalar_select %p71, %s72, %s73
      %p77 = pneg %p71
      %p78 = scmp.eq.s32.totalorder %s15, 1
      %p79 = por %p77, %p78
      %p80 = scmp.ne.s32.totalorder %s72, %s75
      %p81 = scmp.eq.s32.totalorder %s15, 0
      %p82 = por %p80, %p81
      %p83 = scmp.ne.s32.totalorder %s72, %s75
      %p84 = scmp.eq.s32.totalorder %s20, 1
      %p85 = por %p83, %p84
      %p86 = scmp.ne.s32.totalorder %s75, %s76
      %p87 = scmp.eq.s32.totalorder %s20, 0
      %p88 = por %p86, %p87
      %p89 = scmp.ne.s32.totalorder %s75, %s76
      %p90 = scmp.eq.s32.totalorder %s21, 1
      %p91 = por %p89, %p90
      %p93 = scmp.ne.s32.totalorder %s76, %s92
      %p94 = scmp.eq.s32.totalorder %s21, 0
      %p95 = por %p93, %p94
      %s96 = ssub.s32 %s24, %s33
      %p97 = scmp.eq.s32.totalorder %s96, 0
      %s99 = sadd.s32 %s98, 1
      %s100 = scalar_select %p97, %s98, %s99
      %p103 = pneg %p97
      %p104 = scmp.eq.s32.totalorder %s15, 1
      %p105 = por %p103, %p104
      %p106 = scmp.ne.s32.totalorder %s98, %s101
      %p107 = scmp.eq.s32.totalorder %s15, 0
      %p108 = por %p106, %p107
      %p109 = scmp.ne.s32.totalorder %s98, %s101
      %p110 = scmp.eq.s32.totalorder %s20, 1
      %p111 = por %p109, %p110
      %p112 = scmp.ne.s32.totalorder %s101, %s102
      %p113 = scmp.eq.s32.totalorder %s20, 0
      %p114 = por %p112, %p113
      %p115 = scmp.ne.s32.totalorder %s101, %s102
      %p116 = scmp.eq.s32.totalorder %s21, 1
      %p117 = por %p115, %p116
      %p119 = scmp.ne.s32.totalorder %s102, %s118
      %p120 = scmp.eq.s32.totalorder %s21, 0
      %p121 = por %p119, %p120
      %s122 = ssub.s32 %s24, %s33
      %p123 = scmp.eq.s32.totalorder %s122, 0
      %s125 = sadd.s32 %s124, 1
      %s126 = scalar_select %p123, %s124, %s125
      %p129 = pneg %p123
      %p130 = scmp.eq.s32.totalorder %s15, 1
      %p131 = por %p129, %p130
      %p132 = scmp.ne.s32.totalorder %s124, %s127
      %p133 = scmp.eq.s32.totalorder %s15, 0
      %p134 = por %p132, %p133
      %p135 = scmp.ne.s32.totalorder %s124, %s127
      %p136 = scmp.eq.s32.totalorder %s20, 1
      %p137 = por %p135, %p136
      %p138 = scmp.ne.s32.totalorder %s127, %s128
      %p139 = scmp.eq.s32.totalorder %s20, 0
      %p140 = por %p138, %p139
      %p141 = scmp.ne.s32.totalorder %s127, %s128
      %p142 = scmp.eq.s32.totalorder %s21, 1
      %p143 = por %p141, %p142
      %p145 = scmp.ne.s32.totalorder %s128, %s144
      %p146 = scmp.eq.s32.totalorder %s21, 0
      %p147 = por %p145, %p146
      %s148 = ssub.s32 %s24, %s33
      %s149 = ssub.s32 %s22, %s41
      %s150 = sor.u32 %s148, %s149
      %p151 = scmp.eq.s32.totalorder %s150, 0
      %s153 = sadd.s32 %s152, 1
      %s154 = scalar_select %p151, %s152, %s153
      %p157 = pneg %p151
      %p158 = scmp.eq.s32.totalorder %s15, 1
      %p159 = por %p157, %p158
      %p160 = scmp.ne.s32.totalorder %s152, %s155
      %p161 = scmp.eq.s32.totalorder %s15, 0
      %p162 = por %p160, %p161
      %p163 = scmp.ne.s32.totalorder %s152, %s155
      %p164 = scmp.eq.s32.totalorder %s20, 1
      %p165 = por %p163, %p164
      %p166 = scmp.ne.s32.totalorder %s155, %s156
      %p167 = scmp.eq.s32.totalorder %s20, 0
      %p168 = por %p166, %p167
      %p169 = scmp.ne.s32.totalorder %s155, %s156
      %p170 = scmp.eq.s32.totalorder %s21, 1
      %p171 = por %p169, %p170
      %p173 = scmp.ne.s32.totalorder %s156, %s172
      %p174 = scmp.eq.s32.totalorder %s21, 0
      %p175 = por %p173, %p174
      %s176 = ssub.s32 %s23, %s37
      %s177 = ssub.s32 %s22, %s41
      %s178 = sor.u32 %s176, %s177
      %p179 = scmp.eq.s32.totalorder %s178, 0
      %s181 = sadd.s32 %s180, 1
      %s182 = scalar_select %p179, %s180, %s181
      %p185 = pneg %p179
      %p186 = scmp.eq.s32.totalorder %s15, 1
      %p187 = por %p185, %p186
      %p188 = scmp.ne.s32.totalorder %s180, %s183
      %p189 = scmp.eq.s32.totalorder %s15, 0
      %p190 = por %p188, %p189
      %p191 = scmp.ne.s32.totalorder %s180, %s183
      %p192 = scmp.eq.s32.totalorder %s20, 1
      %p193 = por %p191, %p192
      %p194 = scmp.ne.s32.totalorder %s183, %s184
      %p195 = scmp.eq.s32.totalorder %s20, 0
      %p196 = por %p194, %p195
      %p197 = scmp.ne.s32.totalorder %s183, %s184
      %p198 = scmp.eq.s32.totalorder %s21, 1
      %p199 = por %p197, %p198
      %p201 = scmp.ne.s32.totalorder %s184, %s200
      %p202 = scmp.eq.s32.totalorder %s21, 0
      %p203 = por %p201, %p202
      %p204 = scmp.le.s32.totalorder 1, %s15
      %p205 = scmp.lt.s32.totalorder %s15, 3
      %p206 = pnand %p204, %p205
      %p207 = pneg %p206
      // Predicated region
      $region9: #{tpu_custom_call.1} parent=5 // pred_check
        _
      $region10: #{tpu_custom_call.1} parent=5 // pred_check_branch
        %209 = sbr.rel (%p206) target = $region12
      $region11: #{tpu_custom_call.1} parent=5 // pred_region
        %s210 = ssub.s32 %s15, 1
        // Predicated region
        $region13: #{tpu_custom_call.1} parent=11 // pred_check
          %p211 = pneg %p88
        $region14: #{tpu_custom_call.1} parent=11 // pred_check_branch
          %213 = sbr.rel (%p211) target = $region16
        $region15: #{tpu_custom_call.1} parent=11 // pred_region
          %p214 = scmp.lt.s32.totalorder %s27, 0
          %s215 = scalar_select %p214, %s27, 0
          %s216 = smul.addr %s215, 32
          %s217 = smul.addr %s216, 4
          %s218 = scalar_lea.vmem %s1, %s217
        $region16: #{tpu_custom_call.1} parent=11 // pred_fallthru
          _
        // Predicated region
        $region17: #{tpu_custom_call.1} parent=11 // pred_check
          %p219 = pneg %p114
        $region18: #{tpu_custom_call.1} parent=11 // pred_check_branch
          %221 = sbr.rel (%p219) target = $region20
        $region19: #{tpu_custom_call.1} parent=11 // pred_region
          %p222 = scmp.lt.s32.totalorder %s27, 0
          %s223 = scalar_select %p222, %s27, 0
          %s224 = smul.addr %s223, 8
          %s225 = smul.addr %s224, 4
          %s226 = scalar_lea.vmem %s2, %s225
        $region20: #{tpu_custom_call.1} parent=11 // pred_fallthru
          _
        // Predicated region
        $region21: #{tpu_custom_call.1} parent=11 // pred_check
          %p227 = pneg %p140
        $region22: #{tpu_custom_call.1} parent=11 // pred_check_branch
          %229 = sbr.rel (%p227) target = $region24
        $region23: #{tpu_custom_call.1} parent=11 // pred_region
          %p230 = scmp.lt.s32.totalorder %s27, 0
          %s231 = scalar_select %p230, %s27, 0
          %s232 = smul.addr %s231, 8
          %s233 = smul.addr %s232, 4
          %s234 = scalar_lea.vmem %s3, %s233
        $region24: #{tpu_custom_call.1} parent=11 // pred_fallthru
          _
        // Predicated region
        $region25: #{tpu_custom_call.1} parent=11 // pred_check
          %p235 = pneg %p168
        $region26: #{tpu_custom_call.1} parent=11 // pred_check_branch
          %237 = sbr.rel (%p235) target = $region28
        $region27: #{tpu_custom_call.1} parent=11 // pred_region
          %239 = vsyncadd [#allocation3], 0
          %s240 = smul.addr %s27, 32
          %s241 = sadd.s32 %s25, %s240
          %s242 = smul.addr %s241, 8
          %s243 = scalar_lea.hbm %s4, %s242
          %s244 = sshll.u32 %s243, 4
          %s245 = int_to_ptr.hbm [resolvable:$true] %s244
          %s246 = sshll.u32 [#allocation2], 4
          %s247 = int_to_ptr.vmem [resolvable:$true] %s246
          %252 = dma.hbm_to_vmem [thread:$0]  %s245, 4096, %s247, [#allocation3], 128, 128, 8
        $region28: #{tpu_custom_call.1} parent=11 // pred_fallthru
          _
      $region12: #{tpu_custom_call.1} parent=5 // pred_fallthru
        _
      %p253 = scmp.lt.s32.totalorder %s15, 2
      // Predicated region
      $region29: #{tpu_custom_call.1} parent=5 // pred_check
        %p254 = pneg %p253
      $region30: #{tpu_custom_call.1} parent=5 // pred_check_branch
        %256 = sbr.rel (%p254) target = $region32
      $region31: #{tpu_custom_call.1} parent=5 // pred_region
        // Predicated region
        $region33: #{tpu_custom_call.1} parent=31 // pred_check
          %p257 = pneg %p56
        $region34: #{tpu_custom_call.1} parent=31 // pred_check_branch
          %259 = sbr.rel (%p257) target = $region36
        $region35: #{tpu_custom_call.1} parent=31 // pred_region
          %p260 = scmp.lt.s32.totalorder %s23, 1
          %s261 = scalar_select %p260, %s23, 1
          %p262 = scmp.lt.s32.totalorder %s22, 0
          %s263 = scalar_select %p262, %s22, 0
          %s264 = smul.addr %s261, 8
          %s265 = sadd.s32 %s263, %s264
          %s266 = smul.addr %s265, 4
          %s267 = scalar_lea.vmem %s0, %s266
        $region36: #{tpu_custom_call.1} parent=31 // pred_fallthru
          _
      $region32: #{tpu_custom_call.1} parent=5 // pred_fallthru
        _
      %p268 = scmp.le.s32.totalorder 1, %s15
      %p269 = scmp.lt.s32.totalorder %s15, 3
      %p270 = pnand %p268, %p269
      %p271 = pneg %p270
      // Predicated region
      $region37: #{tpu_custom_call.1} parent=5 // pred_check
        _
      $region38: #{tpu_custom_call.1} parent=5 // pred_check_branch
        %273 = sbr.rel (%p270) target = $region40
      $region39: #{tpu_custom_call.1} parent=5 // pred_region
        %s274 = ssub.s32 %s15, 1
        // Predicated region
        $region41: #{tpu_custom_call.1} parent=39 // pred_check
          %p275 = pneg %p168
        $region42: #{tpu_custom_call.1} parent=39 // pred_check_branch
          %277 = sbr.rel (%p275) target = $region44
        $region43: #{tpu_custom_call.1} parent=39 // pred_region
          %279 = dma.done [#allocation3], 4096
        $region44: #{tpu_custom_call.1} parent=39 // pred_fallthru
          _
        %p280 = scmp.lt.s32.totalorder %s26, 1
        %s281 = scalar_select %p280, %s26, 1
        %p282 = scmp.lt.s32.totalorder %s25, 0
        %s283 = scalar_select %p282, %s25, 0
        %s284 = smul.addr %s281, 8
        %s285 = sadd.s32 %s283, %s284
        %s286 = smul.addr %s285, 4
        %s287 = scalar_lea.vmem %s0, %s286
        %p288 = pneg %p62
        %p289 = pneg %p59
        %p290 = scmp.lt.s32.totalorder %s27, 0
        %s291 = scalar_select %p290, %s27, 0
        %s292 = smul.addr %s291, 32
        %s293 = smul.addr %s292, 4
        %s294 = scalar_lea.vmem %s1, %s293
        %p295 = pneg %p88
        %p296 = pneg %p85
        %p297 = scmp.lt.s32.totalorder %s27, 0
        %s298 = scalar_select %p297, %s27, 0
        %s299 = smul.addr %s298, 8
        %s300 = smul.addr %s299, 4
        %s301 = scalar_lea.vmem %s2, %s300
        %p302 = pneg %p114
        %p303 = pneg %p111
        %p304 = scmp.lt.s32.totalorder %s27, 0
        %s305 = scalar_select %p304, %s27, 0
        %s306 = smul.addr %s305, 8
        %s307 = smul.addr %s306, 4
        %s308 = scalar_lea.vmem %s3, %s307
        %p309 = pneg %p140
        %p310 = pneg %p137
        %p311 = pneg %p168
        %p312 = pneg %p165
        %p313 = pneg %p196
        %p314 = pneg %p193
        %s315 = sand.u32 %s183, 1
        %s316 = scalar_lea.sflag [#allocation4], %s315
        %s317 = sand.u32 %s183, 1
        %s318 = smul.addr %s317, 64
        %s319 = scalar_lea.vmem [#allocation5], %s318
        %p320 = scmp.lt.s32.totalorder %s26, 1
        %s321 = scalar_select %p320, %s26, 1
        %p322 = scmp.lt.s32.totalorder %s25, 0
        %s323 = scalar_select %p322, %s25, 0
        %s324 = smul.addr %s321, 8
        %s325 = sadd.s32 %s323, %s324
        %s326 = smul.addr %s325, 4
        %s327 = scalar_lea.vmem %s0, %s326
        %p328 = scmp.lt.s32.totalorder %s27, 0
        %s329 = scalar_select %p328, %s27, 0
        %s330 = smul.addr %s329, 32
        %s331 = smul.addr %s330, 4
        %s332 = scalar_lea.vmem %s1, %s331
        %p333 = scmp.lt.s32.totalorder %s27, 0
        %s334 = scalar_select %p333, %s27, 0
        %s335 = smul.addr %s334, 8
        %s336 = smul.addr %s335, 4
        %s337 = scalar_lea.vmem %s2, %s336
        %p338 = scmp.lt.s32.totalorder %s27, 0
        %s339 = scalar_select %p338, %s27, 0
        %s340 = smul.addr %s339, 8
        %s341 = smul.addr %s340, 4
        %s342 = scalar_lea.vmem %s3, %s341
        %v344 = vld [vmem:[%s327] sm:$0xf]
        %v345 = vld [vmem:[%s327 + $0x4] sm:$0xf]
        %v346 = vld [vmem:[%s327 + $0x8] sm:$0xf]
        %v347 = vld [vmem:[%s327 + $0xc] sm:$0xf]
        %v348 = vld [vmem:[%s327 + $0x10] sm:$0xf]
        %v349 = vld [vmem:[%s327 + $0x14] sm:$0xf]
        %v350 = vld [vmem:[%s327 + $0x18] sm:$0xf]
        %v351 = vld [vmem:[%s327 + $0x1c] sm:$0xf]
        %v352 = vld [vmem:[%s332] sm:$0xf]
        %v353 = vld [vmem:[%s332 + $0x4] sm:$0xf]
        %v354 = vld [vmem:[%s332 + $0x8] sm:$0xf]
        %v355 = vld [vmem:[%s332 + $0xc] sm:$0xf]
        %v356 = vld [vmem:[%s332 + $0x10] sm:$0xf]
        %v357 = vld [vmem:[%s332 + $0x14] sm:$0xf]
        %v358 = vld [vmem:[%s332 + $0x18] sm:$0xf]
        %v359 = vld [vmem:[%s332 + $0x1c] sm:$0xf]
        %v360 = vld [vmem:[%s332 + $0x20] sm:$0xf]
        %v361 = vld [vmem:[%s332 + $0x24] sm:$0xf]
        %v362 = vld [vmem:[%s332 + $0x28] sm:$0xf]
        %v363 = vld [vmem:[%s332 + $0x2c] sm:$0xf]
        %v364 = vld [vmem:[%s332 + $0x30] sm:$0xf]
        %v365 = vld [vmem:[%s332 + $0x34] sm:$0xf]
        %v366 = vld [vmem:[%s332 + $0x38] sm:$0xf]
        %v367 = vld [vmem:[%s332 + $0x3c] sm:$0xf]
        %v368 = vld [vmem:[%s332 + $0x40] sm:$0xf]
        %v369 = vld [vmem:[%s332 + $0x44] sm:$0xf]
        %v370 = vld [vmem:[%s332 + $0x48] sm:$0xf]
        %v371 = vld [vmem:[%s332 + $0x4c] sm:$0xf]
        %v372 = vld [vmem:[%s332 + $0x50] sm:$0xf]
        %v373 = vld [vmem:[%s332 + $0x54] sm:$0xf]
        %v374 = vld [vmem:[%s332 + $0x58] sm:$0xf]
        %v375 = vld [vmem:[%s332 + $0x5c] sm:$0xf]
        %v376 = vld [vmem:[%s332 + $0x60] sm:$0xf]
        %v377 = vld [vmem:[%s332 + $0x64] sm:$0xf]
        %v378 = vld [vmem:[%s332 + $0x68] sm:$0xf]
        %v379 = vld [vmem:[%s332 + $0x6c] sm:$0xf]
        %v380 = vld [vmem:[%s332 + $0x70] sm:$0xf]
        %v381 = vld [vmem:[%s332 + $0x74] sm:$0xf]
        %v382 = vld [vmem:[%s332 + $0x78] sm:$0xf]
        %v383 = vld [vmem:[%s332 + $0x7c] sm:$0xf]
        %v416 = vunpack.c.l.b16 %v352
        %v417 = vunpack.c.l.b16 %v353
        %v418 = vunpack.c.l.b16 %v354
        %v419 = vunpack.c.l.b16 %v355
        %v420 = vunpack.c.l.b16 %v356
        %v421 = vunpack.c.l.b16 %v357
        %v422 = vunpack.c.l.b16 %v358
        %v423 = vunpack.c.l.b16 %v359
        %v424 = vunpack.c.l.b16 %v360
        %v425 = vunpack.c.l.b16 %v361
        %v426 = vunpack.c.l.b16 %v362
        %v427 = vunpack.c.l.b16 %v363
        %v428 = vunpack.c.l.b16 %v364
        %v429 = vunpack.c.l.b16 %v365
        %v430 = vunpack.c.l.b16 %v366
        %v431 = vunpack.c.l.b16 %v367
        %v432 = vunpack.c.l.b16 %v368
        %v433 = vunpack.c.l.b16 %v369
        %v434 = vunpack.c.l.b16 %v370
        %v435 = vunpack.c.l.b16 %v371
        %v436 = vunpack.c.l.b16 %v372
        %v437 = vunpack.c.l.b16 %v373
        %v438 = vunpack.c.l.b16 %v374
        %v439 = vunpack.c.l.b16 %v375
        %v440 = vunpack.c.l.b16 %v376
        %v441 = vunpack.c.l.b16 %v377
        %v442 = vunpack.c.l.b16 %v378
        %v443 = vunpack.c.l.b16 %v379
        %v444 = vunpack.c.l.b16 %v380
        %v445 = vunpack.c.l.b16 %v381
        %v446 = vunpack.c.l.b16 %v382
        %v447 = vunpack.c.l.b16 %v383
        %v448 = vpack.c.b16 %v417, %v416
        %v449 = vpack.c.b16 %v419, %v418
        %v450 = vpack.c.b16 %v421, %v420
        %v451 = vpack.c.b16 %v423, %v422
        %v452 = vpack.c.b16 %v425, %v424
        %v453 = vpack.c.b16 %v427, %v426
        %v454 = vpack.c.b16 %v429, %v428
        %v455 = vpack.c.b16 %v431, %v430
        %v456 = vpack.c.b16 %v433, %v432
        %v457 = vpack.c.b16 %v435, %v434
        %v458 = vpack.c.b16 %v437, %v436
        %v459 = vpack.c.b16 %v439, %v438
        %v460 = vpack.c.b16 %v441, %v440
        %v461 = vpack.c.b16 %v443, %v442
        %v462 = vpack.c.b16 %v445, %v444
        %v463 = vpack.c.b16 %v447, %v446
        %v472 = vunpack.c.l.b16 %v344
        %v473 = vunpack.c.l.b16 %v345
        %v474 = vunpack.c.l.b16 %v346
        %v475 = vunpack.c.l.b16 %v347
        %v476 = vunpack.c.l.b16 %v348
        %v477 = vunpack.c.l.b16 %v349
        %v478 = vunpack.c.l.b16 %v350
        %v479 = vunpack.c.l.b16 %v351
        %v480 = vpack.c.b16 %v473, %v472
        %v481 = vpack.c.b16 %v475, %v474
        %v482 = vpack.c.b16 %v477, %v476
        %v483 = vpack.c.b16 %v479, %v478
        %vm488 = vcmask 523264
        %v490 = vsel %vm488, %v448, 0
        %v493 = vsel %vm488, %v449, 0
        %v496 = vsel %vm488, %v450, 0
        %v499 = vsel %vm488, %v451, 0
        %v502 = vsel %vm488, %v452, 0
        %v505 = vsel %vm488, %v453, 0
        %v508 = vsel %vm488, %v454, 0
        %v511 = vsel %vm488, %v455, 0
        %v514 = vsel %vm488, %v456, 0
        %v517 = vsel %vm488, %v457, 0
        %v520 = vsel %vm488, %v458, 0
        %v523 = vsel %vm488, %v459, 0
        %v526 = vsel %vm488, %v460, 0
        %v529 = vsel %vm488, %v461, 0
        %v532 = vsel %vm488, %v462, 0
        %v535 = vsel %vm488, %v463, 0
        %537 = vmatpush.bf16.msra.mxu0 0
        %538 = vmatpush.bf16.msra.mxu0 0
        %539 = vmatpush.bf16.msra.mxu0 0
        %540 = vmatpush.bf16.msra.mxu0 0
        %541 = vmatpush.bf16.msra.mxu0 %v483
        %542 = vmatpush.bf16.msra.mxu0 %v482
        %543 = vmatpush.bf16.msra.mxu0 %v481
        %544 = vmatpush.bf16.msra.mxu0 %v480
        %545 = vmatmul.bf16.gmra.mxu0 %v490
        %v546 = vpop.f32.mrf.mxu0
        %v547 = vadd.f32 0.0, %v546
        %v548 = vpop.f32.mrf.mxu0
        %v549 = vadd.f32 0.0, %v548
        %550 = vmatmul.bf16.gmra.mxu0 %v493
        %v551 = vpop.f32.mrf.mxu0
        %v552 = vadd.f32 0.0, %v551
        %v553 = vpop.f32.mrf.mxu0
        %v554 = vadd.f32 0.0, %v553
        %555 = vmatmul.bf16.gmra.mxu0 %v496
        %v556 = vpop.f32.mrf.mxu0
        %v557 = vadd.f32 0.0, %v556
        %v558 = vpop.f32.mrf.mxu0
        %v559 = vadd.f32 0.0, %v558
        %560 = vmatmul.bf16.gmra.mxu0 %v499
        %v561 = vpop.f32.mrf.mxu0
        %v562 = vadd.f32 0.0, %v561
        %v563 = vpop.f32.mrf.mxu0
        %v564 = vadd.f32 0.0, %v563
        %565 = vmatmul.bf16.gmra.mxu0 %v502
        %v566 = vpop.f32.mrf.mxu0
        %v567 = vadd.f32 0.0, %v566
        %v568 = vpop.f32.mrf.mxu0
        %v569 = vadd.f32 0.0, %v568
        %570 = vmatmul.bf16.gmra.mxu0 %v505
        %v571 = vpop.f32.mrf.mxu0
        %v572 = vadd.f32 0.0, %v571
        %v573 = vpop.f32.mrf.mxu0
        %v574 = vadd.f32 0.0, %v573
        %575 = vmatmul.bf16.gmra.mxu0 %v508
        %v576 = vpop.f32.mrf.mxu0
        %v577 = vadd.f32 0.0, %v576
        %v578 = vpop.f32.mrf.mxu0
        %v579 = vadd.f32 0.0, %v578
        %580 = vmatmul.bf16.gmra.mxu0 %v511
        %v581 = vpop.f32.mrf.mxu0
        %v582 = vadd.f32 0.0, %v581
        %v583 = vpop.f32.mrf.mxu0
        %v584 = vadd.f32 0.0, %v583
        %585 = vmatmul.bf16.gmra.mxu0 %v514
        %v586 = vpop.f32.mrf.mxu0
        %v587 = vadd.f32 0.0, %v586
        %v588 = vpop.f32.mrf.mxu0
        %v589 = vadd.f32 0.0, %v588
        %590 = vmatmul.bf16.gmra.mxu0 %v517
        %v591 = vpop.f32.mrf.mxu0
        %v592 = vadd.f32 0.0, %v591
        %v593 = vpop.f32.mrf.mxu0
        %v594 = vadd.f32 0.0, %v593
        %595 = vmatmul.bf16.gmra.mxu0 %v520
        %v596 = vpop.f32.mrf.mxu0
        %v597 = vadd.f32 0.0, %v596
        %v598 = vpop.f32.mrf.mxu0
        %v599 = vadd.f32 0.0, %v598
        %600 = vmatmul.bf16.gmra.mxu0 %v523
        %v601 = vpop.f32.mrf.mxu0
        %v602 = vadd.f32 0.0, %v601
        %v603 = vpop.f32.mrf.mxu0
        %v604 = vadd.f32 0.0, %v603
        %605 = vmatmul.bf16.gmra.mxu0 %v526
        %v606 = vpop.f32.mrf.mxu0
        %v607 = vadd.f32 0.0, %v606
        %v608 = vpop.f32.mrf.mxu0
        %v609 = vadd.f32 0.0, %v608
        %610 = vmatmul.bf16.gmra.mxu0 %v529
        %v611 = vpop.f32.mrf.mxu0
        %v612 = vadd.f32 0.0, %v611
        %v613 = vpop.f32.mrf.mxu0
        %v614 = vadd.f32 0.0, %v613
        %615 = vmatmul.bf16.gmra.mxu0 %v532
        %v616 = vpop.f32.mrf.mxu0
        %v617 = vadd.f32 0.0, %v616
        %v618 = vpop.f32.mrf.mxu0
        %v619 = vadd.f32 0.0, %v618
        %620 = vmatmul.bf16.gmra.mxu0 %v535
        %v621 = vpop.f32.mrf.mxu0
        %v622 = vadd.f32 0.0, %v621
        %v623 = vpop.f32.mrf.mxu0
        %v624 = vadd.f32 0.0, %v623
        %625 = vdwg.mxu0
        %v626 = vld [vmem:[#allocation2] sm:$0xff]
        %v627 = vld [vmem:[#allocation2 + $0x8] sm:$0xff]
        %v628 = vld [vmem:[#allocation2 + $0x10] sm:$0xff]
        %v629 = vld [vmem:[#allocation2 + $0x18] sm:$0xff]
        %v630 = vld [vmem:[#allocation2 + $0x20] sm:$0xff]
        %v631 = vld [vmem:[#allocation2 + $0x28] sm:$0xff]
        %v632 = vld [vmem:[#allocation2 + $0x30] sm:$0xff]
        %v633 = vld [vmem:[#allocation2 + $0x38] sm:$0xff]
        %v634 = vld [vmem:[#allocation2 + $0x40] sm:$0xff]
        %v635 = vld [vmem:[#allocation2 + $0x48] sm:$0xff]
        %v636 = vld [vmem:[#allocation2 + $0x50] sm:$0xff]
        %v637 = vld [vmem:[#allocation2 + $0x58] sm:$0xff]
        %v638 = vld [vmem:[#allocation2 + $0x60] sm:$0xff]
        %v639 = vld [vmem:[#allocation2 + $0x68] sm:$0xff]
        %v640 = vld [vmem:[#allocation2 + $0x70] sm:$0xff]
        %v641 = vld [vmem:[#allocation2 + $0x78] sm:$0xff]
        %v642 = vld [vmem:[#allocation2 + $0x80] sm:$0xff]
        %v643 = vld [vmem:[#allocation2 + $0x88] sm:$0xff]
        %v644 = vld [vmem:[#allocation2 + $0x90] sm:$0xff]
        %v645 = vld [vmem:[#allocation2 + $0x98] sm:$0xff]
        %v646 = vld [vmem:[#allocation2 + $0xa0] sm:$0xff]
        %v647 = vld [vmem:[#allocation2 + $0xa8] sm:$0xff]
        %v648 = vld [vmem:[#allocation2 + $0xb0] sm:$0xff]
        %v649 = vld [vmem:[#allocation2 + $0xb8] sm:$0xff]
        %v650 = vld [vmem:[#allocation2 + $0xc0] sm:$0xff]
        %v651 = vld [vmem:[#allocation2 + $0xc8] sm:$0xff]
        %v652 = vld [vmem:[#allocation2 + $0xd0] sm:$0xff]
        %v653 = vld [vmem:[#allocation2 + $0xd8] sm:$0xff]
        %v654 = vld [vmem:[#allocation2 + $0xe0] sm:$0xff]
        %v655 = vld [vmem:[#allocation2 + $0xe8] sm:$0xff]
        %v656 = vld [vmem:[#allocation2 + $0xf0] sm:$0xff]
        %v657 = vld [vmem:[#allocation2 + $0xf8] sm:$0xff]
        %v658 = vmul.f32 %v547, %v626
        %v659 = vmul.f32 %v549, %v627
        %v660 = vmul.f32 %v552, %v628
        %v661 = vmul.f32 %v554, %v629
        %v662 = vmul.f32 %v557, %v630
        %v663 = vmul.f32 %v559, %v631
        %v664 = vmul.f32 %v562, %v632
        %v665 = vmul.f32 %v564, %v633
        %v666 = vmul.f32 %v567, %v634
        %v667 = vmul.f32 %v569, %v635
        %v668 = vmul.f32 %v572, %v636
        %v669 = vmul.f32 %v574, %v637
        %v670 = vmul.f32 %v577, %v638
        %v671 = vmul.f32 %v579, %v639
        %v672 = vmul.f32 %v582, %v640
        %v673 = vmul.f32 %v584, %v641
        %v674 = vmul.f32 %v587, %v642
        %v675 = vmul.f32 %v589, %v643
        %v676 = vmul.f32 %v592, %v644
        %v677 = vmul.f32 %v594, %v645
        %v678 = vmul.f32 %v597, %v646
        %v679 = vmul.f32 %v599, %v647
        %v680 = vmul.f32 %v602, %v648
        %v681 = vmul.f32 %v604, %v649
        %v682 = vmul.f32 %v607, %v650
        %v683 = vmul.f32 %v609, %v651
        %v684 = vmul.f32 %v612, %v652
        %v685 = vmul.f32 %v614, %v653
        %v686 = vmul.f32 %v617, %v654
        %v687 = vmul.f32 %v619, %v655
        %v688 = vmul.f32 %v622, %v656
        %v689 = vmul.f32 %v624, %v657
        %v690 = vsub.f32 %v658, %v674
        %v691 = vsub.f32 %v659, %v675
        %v692 = vsub.f32 %v660, %v676
        %v693 = vsub.f32 %v661, %v677
        %v694 = vsub.f32 %v662, %v678
        %v695 = vsub.f32 %v663, %v679
        %v696 = vsub.f32 %v664, %v680
        %v697 = vsub.f32 %v665, %v681
        %v698 = vsub.f32 %v666, %v682
        %v699 = vsub.f32 %v667, %v683
        %v700 = vsub.f32 %v668, %v684
        %v701 = vsub.f32 %v669, %v685
        %v702 = vsub.f32 %v670, %v686
        %v703 = vsub.f32 %v671, %v687
        %v704 = vsub.f32 %v672, %v688
        %v705 = vsub.f32 %v673, %v689
        %v706 = vpack.c.bf16 %v691, %v690
        %v707 = vpack.c.bf16 %v693, %v692
        %v708 = vpack.c.bf16 %v695, %v694
        %v709 = vpack.c.bf16 %v697, %v696
        %v710 = vpack.c.bf16 %v699, %v698
        %v711 = vpack.c.bf16 %v701, %v700
        %v712 = vpack.c.bf16 %v703, %v702
        %v713 = vpack.c.bf16 %v705, %v704
        %v714 = vmul.f32 %v547, %v642
        %v715 = vmul.f32 %v549, %v643
        %v716 = vmul.f32 %v552, %v644
        %v717 = vmul.f32 %v554, %v645
        %v718 = vmul.f32 %v557, %v646
        %v719 = vmul.f32 %v559, %v647
        %v720 = vmul.f32 %v562, %v648
        %v721 = vmul.f32 %v564, %v649
        %v722 = vmul.f32 %v567, %v650
        %v723 = vmul.f32 %v569, %v651
        %v724 = vmul.f32 %v572, %v652
        %v725 = vmul.f32 %v574, %v653
        %v726 = vmul.f32 %v577, %v654
        %v727 = vmul.f32 %v579, %v655
        %v728 = vmul.f32 %v582, %v656
        %v729 = vmul.f32 %v584, %v657
        %v730 = vmul.f32 %v587, %v626
        %v731 = vmul.f32 %v589, %v627
        %v732 = vmul.f32 %v592, %v628
        %v733 = vmul.f32 %v594, %v629
        %v734 = vmul.f32 %v597, %v630
        %v735 = vmul.f32 %v599, %v631
        %v736 = vmul.f32 %v602, %v632
        %v737 = vmul.f32 %v604, %v633
        %v738 = vmul.f32 %v607, %v634
        %v739 = vmul.f32 %v609, %v635
        %v740 = vmul.f32 %v612, %v636
        %v741 = vmul.f32 %v614, %v637
        %v742 = vmul.f32 %v617, %v638
        %v743 = vmul.f32 %v619, %v639
        %v744 = vmul.f32 %v622, %v640
        %v745 = vmul.f32 %v624, %v641
        %v746 = vadd.f32 %v714, %v730
        %v747 = vadd.f32 %v715, %v731
        %v748 = vadd.f32 %v716, %v732
        %v749 = vadd.f32 %v717, %v733
        %v750 = vadd.f32 %v718, %v734
        %v751 = vadd.f32 %v719, %v735
        %v752 = vadd.f32 %v720, %v736
        %v753 = vadd.f32 %v721, %v737
        %v754 = vadd.f32 %v722, %v738
        %v755 = vadd.f32 %v723, %v739
        %v756 = vadd.f32 %v724, %v740
        %v757 = vadd.f32 %v725, %v741
        %v758 = vadd.f32 %v726, %v742
        %v759 = vadd.f32 %v727, %v743
        %v760 = vadd.f32 %v728, %v744
        %v761 = vadd.f32 %v729, %v745
        %v762 = vpack.c.bf16 %v747, %v746
        %v763 = vpack.c.bf16 %v749, %v748
        %v764 = vpack.c.bf16 %v751, %v750
        %v765 = vpack.c.bf16 %v753, %v752
        %v766 = vpack.c.bf16 %v755, %v754
        %v767 = vpack.c.bf16 %v757, %v756
        %v768 = vpack.c.bf16 %v759, %v758
        %v769 = vpack.c.bf16 %v761, %v760
        %v770 = vld [vmem:[%s337] sm:$0xf]
        %v771 = vld [vmem:[%s337 + $0x4] sm:$0xf]
        %v772 = vld [vmem:[%s337 + $0x8] sm:$0xf]
        %v773 = vld [vmem:[%s337 + $0xc] sm:$0xf]
        %v774 = vld [vmem:[%s337 + $0x10] sm:$0xf]
        %v775 = vld [vmem:[%s337 + $0x14] sm:$0xf]
        %v776 = vld [vmem:[%s337 + $0x18] sm:$0xf]
        %v777 = vld [vmem:[%s337 + $0x1c] sm:$0xf]
        %v778 = vld [vmem:[%s342] sm:$0xf]
        %v779 = vld [vmem:[%s342 + $0x4] sm:$0xf]
        %v780 = vld [vmem:[%s342 + $0x8] sm:$0xf]
        %v781 = vld [vmem:[%s342 + $0xc] sm:$0xf]
        %v782 = vld [vmem:[%s342 + $0x10] sm:$0xf]
        %v783 = vld [vmem:[%s342 + $0x14] sm:$0xf]
        %v784 = vld [vmem:[%s342 + $0x18] sm:$0xf]
        %v785 = vld [vmem:[%s342 + $0x1c] sm:$0xf]
        %v794 = vunpack.c.l.b16 %v778
        %v795 = vunpack.c.l.b16 %v779
        %v796 = vunpack.c.l.b16 %v780
        %v797 = vunpack.c.l.b16 %v781
        %v798 = vunpack.c.l.b16 %v782
        %v799 = vunpack.c.l.b16 %v783
        %v800 = vunpack.c.l.b16 %v784
        %v801 = vunpack.c.l.b16 %v785
        %v802 = vpack.c.b16 %v795, %v794
        %v803 = vpack.c.b16 %v797, %v796
        %v804 = vpack.c.b16 %v799, %v798
        %v805 = vpack.c.b16 %v801, %v800
        %810 = vmatpush.bf16.msra.mxu0 %v769
        %811 = vmatpush.bf16.msra.mxu0 %v768
        %812 = vmatpush.bf16.msra.mxu0 %v767
        %813 = vmatpush.bf16.msra.mxu0 %v766
        %814 = vmatpush.bf16.msra.mxu0 %v765
        %815 = vmatpush.bf16.msra.mxu0 %v764
        %816 = vmatpush.bf16.msra.mxu0 %v763
        %817 = vmatpush.bf16.msra.mxu0 %v762
        %818 = vmatmul.bf16.gmra.mxu0 %v802
        %v819 = vpop.f32.mrf.mxu0
        %v820 = vadd.f32 0.0, %v819
        %v821 = vpop.f32.mrf.mxu0
        %v822 = vadd.f32 0.0, %v821
        %823 = vmatmul.bf16.gmra.mxu0 %v803
        %v824 = vpop.f32.mrf.mxu0
        %v825 = vadd.f32 0.0, %v824
        %v826 = vpop.f32.mrf.mxu0
        %v827 = vadd.f32 0.0, %v826
        %828 = vmatmul.bf16.gmra.mxu0 %v804
        %v829 = vpop.f32.mrf.mxu0
        %v830 = vadd.f32 0.0, %v829
        %v831 = vpop.f32.mrf.mxu0
        %v832 = vadd.f32 0.0, %v831
        %833 = vmatmul.bf16.gmra.mxu0 %v805
        %v834 = vpop.f32.mrf.mxu0
        %v835 = vadd.f32 0.0, %v834
        %v836 = vpop.f32.mrf.mxu0
        %v837 = vadd.f32 0.0, %v836
        %838 = vdwg.mxu0
        %v847 = vunpack.c.l.b16 %v770
        %v848 = vunpack.c.l.b16 %v771
        %v849 = vunpack.c.l.b16 %v772
        %v850 = vunpack.c.l.b16 %v773
        %v851 = vunpack.c.l.b16 %v774
        %v852 = vunpack.c.l.b16 %v775
        %v853 = vunpack.c.l.b16 %v776
        %v854 = vunpack.c.l.b16 %v777
        %v855 = vpack.c.b16 %v848, %v847
        %v856 = vpack.c.b16 %v850, %v849
        %v857 = vpack.c.b16 %v852, %v851
        %v858 = vpack.c.b16 %v854, %v853
        %863 = vmatpush.bf16.msra.mxu0 %v713
        %864 = vmatpush.bf16.msra.mxu0 %v712
        %865 = vmatpush.bf16.msra.mxu0 %v711
        %866 = vmatpush.bf16.msra.mxu0 %v710
        %867 = vmatpush.bf16.msra.mxu0 %v709
        %868 = vmatpush.bf16.msra.mxu0 %v708
        %869 = vmatpush.bf16.msra.mxu0 %v707
        %870 = vmatpush.bf16.msra.mxu0 %v706
        %871 = vmatmul.bf16.gmra.mxu0 %v855
        %v872 = vpop.f32.mrf.mxu0
        %v873 = vadd.f32 %v820, %v872
        %v874 = vpop.f32.mrf.mxu0
        %v875 = vadd.f32 %v822, %v874
        %876 = vmatmul.bf16.gmra.mxu0 %v856
        %v877 = vpop.f32.mrf.mxu0
        %v878 = vadd.f32 %v825, %v877
        %v879 = vpop.f32.mrf.mxu0
        %v880 = vadd.f32 %v827, %v879
        %881 = vmatmul.bf16.gmra.mxu0 %v857
        %v882 = vpop.f32.mrf.mxu0
        %v883 = vadd.f32 %v830, %v882
        %v884 = vpop.f32.mrf.mxu0
        %v885 = vadd.f32 %v832, %v884
        %886 = vmatmul.bf16.gmra.mxu0 %v858
        %v887 = vpop.f32.mrf.mxu0
        %v888 = vadd.f32 %v835, %v887
        %v889 = vpop.f32.mrf.mxu0
        %v890 = vadd.f32 %v837, %v889
        %891 = vdwg.mxu0
        %892 = vst [vmem:[%s319] sm:$0xff] %v873
        %893 = vst [vmem:[%s319 + $0x8] sm:$0xff] %v875
        %894 = vst [vmem:[%s319 + $0x10] sm:$0xff] %v878
        %895 = vst [vmem:[%s319 + $0x18] sm:$0xff] %v880
        %896 = vst [vmem:[%s319 + $0x20] sm:$0xff] %v883
        %897 = vst [vmem:[%s319 + $0x28] sm:$0xff] %v885
        %898 = vst [vmem:[%s319 + $0x30] sm:$0xff] %v888
        %899 = vst [vmem:[%s319 + $0x38] sm:$0xff] %v890
        %s900 = sand.u32 %s183, 1
        %s901 = scalar_lea.sflag [#allocation4], %s900
        %s902 = sand.u32 %s183, 1
        %s903 = smul.addr %s902, 64
        %s904 = scalar_lea.vmem [#allocation5], %s903
        // Predicated region
        $region45: #{tpu_custom_call.1} parent=39 // pred_check
          %p905 = pneg %p193
        $region46: #{tpu_custom_call.1} parent=39 // pred_check_branch
          %907 = sbr.rel (%p905) target = $region48
        $region47: #{tpu_custom_call.1} parent=39 // pred_region
          %909 = vsyncadd %s901, 0
          %s910 = smul.addr %s26, 8
          %s911 = sadd.s32 %s25, %s910
          %s912 = smul.addr %s911, 8
          %s913 = scalar_lea.hbm %s5, %s912
          %s914 = sshll.u32 %s904, 4
          %s915 = int_to_ptr.vmem [resolvable:$true] %s914
          %s916 = sshll.u32 %s913, 4
          %s917 = int_to_ptr.hbm [resolvable:$true] %s916
          %922 = dma.vmem_to_hbm [thread:$0]  %s915, 1024, %s917, %s901, 128, 128, 8
        $region48: #{tpu_custom_call.1} parent=39 // pred_fallthru
          _
      $region40: #{tpu_custom_call.1} parent=5 // pred_fallthru
        _
      %p923 = scmp.le.s32.totalorder 2, %s15
      // Predicated region
      $region49: #{tpu_custom_call.1} parent=5 // pred_check
        %p924 = pneg %p923
      $region50: #{tpu_custom_call.1} parent=5 // pred_check_branch
        %926 = sbr.rel (%p924) target = $region52
      $region51: #{tpu_custom_call.1} parent=5 // pred_region
        %s927 = ssub.s32 %s15, 2
        // Predicated region
        $region53: #{tpu_custom_call.1} parent=51 // pred_check
          %p928 = pneg %p199
        $region54: #{tpu_custom_call.1} parent=51 // pred_check_branch
          %930 = sbr.rel (%p928) target = $region56
        $region55: #{tpu_custom_call.1} parent=51 // pred_region
          %s931 = sand.u32 %s184, 1
          %s932 = scalar_lea.sflag [#allocation4], %s931
          %s933 = sand.u32 %s184, 1
          %s934 = smul.addr %s933, 64
          %s935 = scalar_lea.vmem [#allocation5], %s934
          %937 = dma.done %s932, 1024
        $region56: #{tpu_custom_call.1} parent=51 // pred_fallthru
          _
      $region52: #{tpu_custom_call.1} parent=5 // pred_fallthru
        _
    $region6: #{tpu_custom_call.1} parent=1 // loop_footer
      %s19 = sadd.s32 1, %s15
    $region7: #{tpu_custom_call.1} parent=1 // loop_footer_branch
      %14 = sbr.rel target = $region3
    $region8: #{tpu_custom_call.1} parent=1 // loop_exit
      _
    %938 = vsyncpa [#allocation3], 1
    %s939 = scalar_lea.sflag [#allocation3], 1
    %940 = vsyncpa %s939, 1
    %941 = vsyncpa [#allocation4], 1
    %s942 = scalar_lea.sflag [#allocation4], 1
    %943 = vsyncpa %s942, 1

</llo_original>
